<compile_context>
chip_gen: v6e
topology: v6e:2x2x1
jax: 0.10.0
libtpu: 0.0.40
codegen_flags: <defaults>
</compile_context>

<pallas_src>
import jax
import jax.numpy as jnp
import numpy as np
from jax.experimental import pallas as pl
from jax.experimental.pallas import tpu as pltpu

B, C, Hdim, WIN = 2, 10, 1, 4      # input NCHW, W_in = Linear in-features
DLIN, H1, H2 = 10, 16, 8           # Linear out-features, LSTM hidden sizes
MROWS = B * DLIN                   # 20 independent LSTM positions (all batches)
GW = 128                           # lane-aligned width of each gate group
NG = 3 * GW                        # packed gate lanes: [i | g | o]

# Consolidated parameter-slab layout (f32, one VMEM operand):
#   rows  0..9   cols 0..383 : wg      (C, 3*128) packed gate weights
#   rows 16..35  cols 0..383 : bg_eff2 (B*DLIN, 3*128) folded biases (tiled over B)
#   rows 40..167 cols 0..127 : E       (128, 128) expansion matrix
#   rows 40..59  cols 128..135: A      (B*DLIN, B*WIN) block-diag Linear weight
SLAB_H, SLAB_W = 168, 384
R_WG, R_BG, R_E = 0, 16, 40


# ---------------------------------------------------------------------------
# Single fused kernel: 3 plain 2-D MXU matmuls + EUP nonlinearities,
# one unmasked lane-dense (20, 128) output store.
# ---------------------------------------------------------------------------
def fused_kernel(xf_ref, w_ref, out_ref):
    """xf_ref : (B*WIN, C)     input, xf[(b,w), c] = x0[b, c, 0, w]
       w_ref  : (SLAB_H, SLAB_W) consolidated constants (see layout above)
       out_ref: (B*DLIN, 128)  lane-dense result slab
    """
    xf = xf_ref[...]                                        # (8, 10)
    wg = w_ref[R_WG:R_WG + C, :]                            # (10, 384)
    bg = w_ref[R_BG:R_BG + MROWS, :]                        # (20, 384)
    E = w_ref[R_E:R_E + 128, 0:128]                         # (128, 128)
    A = w_ref[R_E:R_E + MROWS, 128:128 + B * WIN]           # (20, 8)

    # lstm_in rows for all (b, j): p[(b,j), c] = Linear(x0)[b, c, 0, j]
    # (the v0 -> v1 permute is folded into the block-diagonal matmul A @ xf).
    p = jnp.dot(A, xf, preferred_element_type=jnp.float32)          # (20, 10)

    # ONE packed MXU matmul produces the i/g/o gates of BOTH LSTM cells
    # (Linear bias already folded into bg at pack time).
    gates = jnp.dot(p, wg, preferred_element_type=jnp.float32) + bg  # (20, 384)

    zi = jax.nn.sigmoid(gates[:, 0:GW])          # input gates  [cell1|cell2|0]
    zg = jnp.tanh(gates[:, GW:2 * GW])           # cell  gates  [cell1|cell2|0]
    zo = jax.nn.sigmoid(gates[:, 2 * GW:3 * GW])  # output gates [cell1|cell2|0]
    # c0 == 0  =>  c1 = sigmoid(i)*tanh(g);  h' = sigmoid(o)*tanh(c1)
    h = zo * jnp.tanh(zi * zg)                   # (20, 128): lanes [h1 | h2 | 0]

    # Expansion matmul realizes v8.permute(0,3,2,1) + 2*v2 in one shot:
    #   out[(b,j), n2*H1+n1] = 2*h1[(b,j), n1] + h2[(b,j), n2]
    out_ref[...] = jnp.dot(h, E, preferred_element_type=jnp.float32)  # (20, 128)


# ---------------------------------------------------------------------------
# One-time weight packing (outside the jitted forward; no per-call glue).
# ---------------------------------------------------------------------------
def pack_params(p):
    # torch LSTMCell gate order: i, f, g, o.  Forget gate dropped (c0 == 0);
    # weight_hh is mathematically irrelevant (h0 == 0).
    def sel(w, b_ih, b_hh, hidden):
        bsum = b_ih + b_hh
        pick = lambda a, g: a[g * hidden:(g + 1) * hidden]
        return ([pick(w, 0), pick(w, 2), pick(w, 3)],
                [pick(bsum, 0), pick(bsum, 2), pick(bsum, 3)])

    w1, b1 = sel(p["w_ih1"], p["b_ih1"], p["b_hh1"], H1)
    w2, b2 = sel(p["w_ih2"], p["b_ih2"], p["b_hh2"], H2)

    # 128-lane-aligned gate groups: lanes [0:16]=cell1, [16:24]=cell2, rest 0.
    wg = jnp.zeros((C, NG), jnp.float32)
    bgv = jnp.zeros((NG,), jnp.float32)
    for gi in range(3):
        off = gi * GW
        wg = (wg.at[:, off:off + H1].set(w1[gi].T)
                .at[:, off + H1:off + H1 + H2].set(w2[gi].T))
        bgv = (bgv.at[off:off + H1].set(b1[gi])
                  .at[off + H1:off + H1 + H2].set(b2[gi]))

    # Fold the Linear bias through the gate matmul:
    #   gates = (p + bl) @ wg + bg  ==  p @ wg + (bg + bl * sum_c wg[c, :])
    bg_eff = bgv[None, :] + p["bl"][:, None] * jnp.sum(wg, axis=0, keepdims=True)
    bg_eff2 = jnp.tile(bg_eff, (B, 1))                       # (B*DLIN, 384)

    # Block-diagonal Linear weight: A[(b,d), (b',w)] = wl[d,w] * [b == b'],
    # so a single 2-D matmul handles all batches (no in-kernel batch loop).
    A = np.zeros((MROWS, B * WIN), np.float32)
    wl_np = np.asarray(p["wl"], np.float32)
    for b in range(B):
        A[b * DLIN:(b + 1) * DLIN, b * WIN:(b + 1) * WIN] = wl_np

    # Expansion matrix: E[k, n2*H1+n1] = 2*[k==n1] + [k==H1+n2]
    E = np.zeros((128, H2 * H1), np.float32)
    for n2 in range(H2):
        E[0:H1, n2 * H1:(n2 + 1) * H1] += 2.0 * np.eye(H1, dtype=np.float32)
        E[H1 + n2, n2 * H1:(n2 + 1) * H1] += 1.0

    slab = jnp.zeros((SLAB_H, SLAB_W), jnp.float32)
    slab = slab.at[R_WG:R_WG + C, :].set(wg)
    slab = slab.at[R_BG:R_BG + MROWS, :].set(bg_eff2)
    slab = slab.at[R_E:R_E + 128, 0:128].set(jnp.asarray(E))
    slab = slab.at[R_E:R_E + MROWS, 128:128 + B * WIN].set(jnp.asarray(A))
    return slab


@jax.jit
def model_forward(x0, slab):
    # xf[(b,w), c] = x0[b, c, 0, w]  (tiny XLA-side reshape/transpose, 320 B)
    xf = x0.reshape(B, C, WIN).transpose(0, 2, 1).reshape(B * WIN, C)

    vmem = pl.BlockSpec(memory_space=pltpu.MemorySpace.VMEM)
    cost = pl.CostEstimate(
        flops=2 * MROWS * (B * WIN * C + C * NG + 128 * 128),
        transcendentals=4 * MROWS * GW,
        bytes_accessed=4 * (B * WIN * C + SLAB_H * SLAB_W + MROWS * 128),
    )
    out2d = pl.pallas_call(
        fused_kernel,
        out_shape=jax.ShapeDtypeStruct((MROWS, H2 * H1), jnp.float32),
        in_specs=[vmem, vmem],
        out_specs=vmem,
        cost_estimate=cost,
    )(xf, slab)

    # lane-dense (20, 128) -> contract layout (B, H2, DLIN, H1); only 10 KB.
    return out2d.reshape(B, DLIN, H2, H1).transpose(0, 2, 1, 3)


# ---------------------------------------------------------------------------
# Pure-JAX reference (same interpretation), used only as a correctness check
# ---------------------------------------------------------------------------
def reference(x0, p):
    v0 = jnp.einsum("bchk,jk->bchj", x0, p["wl"]) + p["bl"]
    v1 = jnp.transpose(v0, (0, 2, 3, 1))

    def lstm(xin, w_ih, b_ih, b_hh):
        g = jnp.einsum("...k,gk->...g", xin, w_ih) + b_ih + b_hh
        i, _, gg, o = jnp.split(g, 4, axis=-1)
        c1 = jax.nn.sigmoid(i) * jnp.tanh(gg)
        return jax.nn.sigmoid(o) * jnp.tanh(c1)

    v2 = lstm(v1, p["w_ih1"], p["b_ih1"], p["b_hh1"])
    v8 = lstm(v1, p["w_ih2"], p["b_ih2"], p["b_hh2"])
    return jnp.transpose(v8, (0, 3, 2, 1)) + v2 * 2.0


def init_params(key):
    ks = jax.random.split(key, 8)

    def u(k, shape, fan_in):
        bound = 1.0 / np.sqrt(fan_in)
        return jax.random.uniform(k, shape, jnp.float32, -bound, bound)

    return {
        "wl":    u(ks[0], (DLIN, WIN), WIN),
        "bl":    u(ks[1], (DLIN,), WIN),
        "w_ih1": u(ks[2], (4 * H1, DLIN), H1),
        "b_ih1": u(ks[3], (4 * H1,), H1),
        "b_hh1": u(ks[4], (4 * H1,), H1),
        "w_ih2": u(ks[5], (4 * H2, DLIN), H2),
        "b_ih2": u(ks[6], (4 * H2,), H2),
        "b_hh2": u(ks[7], (4 * H2,), H2),
    }


if __name__ == "__main__":
    key = jax.random.PRNGKey(0)
    kx, kp = jax.random.split(key)
    x0 = jax.random.normal(kx, (B, C, Hdim, WIN), jnp.float32)
    params = init_params(kp)
    slab = pack_params(params)            # one-time packing, not in hot path

    out = jax.block_until_ready(model_forward(x0, slab))

    ref = reference(x0, params)
    assert out.shape == (B, H2, DLIN, H1), out.shape
    np.testing.assert_allclose(np.asarray(out), np.asarray(ref),
                               rtol=1e-5, atol=1e-5)
    print("KERNEL_OK")
</pallas_src>

<mosaic_0001>
module attributes {stable_mosaic.version = 11 : i64} {
  func.func @fused_kernel(%arg0: memref<8x10xf32, #tpu.memory_space<vmem>>, %arg1: memref<168x384xf32, #tpu.memory_space<vmem>>, %arg2: memref<20x128xf32, #tpu.memory_space<vmem>>) attributes {dimension_semantics = [], scalar_prefetch = 0 : i64, scratch_operands = 0 : i64, tpu.core_type = #tpu.core_type<tc>} {
    %c0 = arith.constant 0 : index
    %c0_0 = arith.constant 0 : index
    %0 = vector.load %arg0[%c0, %c0_0] : memref<8x10xf32, #tpu.memory_space<vmem>>, vector<8x10xf32>
    %c0_1 = arith.constant 0 : index
    %c0_2 = arith.constant 0 : index
    %1 = vector.load %arg1[%c0_1, %c0_2] : memref<168x384xf32, #tpu.memory_space<vmem>>, vector<10x384xf32>
    %c16 = arith.constant 16 : index
    %c0_3 = arith.constant 0 : index
    %2 = vector.load %arg1[%c16, %c0_3] : memref<168x384xf32, #tpu.memory_space<vmem>>, vector<20x384xf32>
    %c40 = arith.constant 40 : index
    %c0_4 = arith.constant 0 : index
    %3 = vector.load %arg1[%c40, %c0_4] : memref<168x384xf32, #tpu.memory_space<vmem>>, vector<128x128xf32>
    %c40_5 = arith.constant 40 : index
    %c128 = arith.constant 128 : index
    %4 = vector.load %arg1[%c40_5, %c128] : memref<168x384xf32, #tpu.memory_space<vmem>>, vector<20x8xf32>
    %cst = arith.constant dense<0.000000e+00> : vector<20x10xf32>
    %5 = tpu.matmul %4, %0, %cst {dimension_numbers = #tpu.dot_dimension_numbers<[1], [0], [0], [1], [0, 0, 1, 1], [], []>} : vector<20x8xf32>, vector<8x10xf32>, vector<20x10xf32> -> vector<20x10xf32>
    %cst_6 = arith.constant dense<0.000000e+00> : vector<20x384xf32>
    %6 = tpu.matmul %5, %1, %cst_6 {dimension_numbers = #tpu.dot_dimension_numbers<[1], [0], [0], [1], [0, 0, 1, 1], [], []>} : vector<20x10xf32>, vector<10x384xf32>, vector<20x384xf32> -> vector<20x384xf32>
    %7 = arith.addf %6, %2 : vector<20x384xf32>
    %8 = vector.extract_strided_slice %7 {offsets = [0, 0], sizes = [20, 128], strides = [1, 1]} : vector<20x384xf32> to vector<20x128xf32>
    %9 = arith.negf %8 : vector<20x128xf32>
    %10 = math.exp %9 : vector<20x128xf32>
    %cst_7 = arith.constant 1.000000e+00 : f32
    %11 = vector.broadcast %cst_7 : f32 to vector<20x128xf32>
    %12 = arith.addf %11, %10 : vector<20x128xf32>
    %13 = arith.divf %11, %12 : vector<20x128xf32>
    %14 = vector.extract_strided_slice %7 {offsets = [0, 128], sizes = [20, 128], strides = [1, 1]} : vector<20x384xf32> to vector<20x128xf32>
    %15 = math.tanh %14 : vector<20x128xf32>
    %16 = vector.extract_strided_slice %7 {offsets = [0, 256], sizes = [20, 128], strides = [1, 1]} : vector<20x384xf32> to vector<20x128xf32>
    %17 = arith.negf %16 : vector<20x128xf32>
    %18 = math.exp %17 : vector<20x128xf32>
    %cst_8 = arith.constant 1.000000e+00 : f32
    %19 = vector.broadcast %cst_8 : f32 to vector<20x128xf32>
    %20 = arith.addf %19, %18 : vector<20x128xf32>
    %21 = arith.divf %19, %20 : vector<20x128xf32>
    %22 = arith.mulf %13, %15 : vector<20x128xf32>
    %23 = math.tanh %22 : vector<20x128xf32>
    %24 = arith.mulf %21, %23 : vector<20x128xf32>
    %cst_9 = arith.constant dense<0.000000e+00> : vector<20x128xf32>
    %25 = tpu.matmul %24, %3, %cst_9 {dimension_numbers = #tpu.dot_dimension_numbers<[1], [0], [0], [1], [0, 0, 1, 1], [], []>} : vector<20x128xf32>, vector<128x128xf32>, vector<20x128xf32> -> vector<20x128xf32>
    %c0_10 = arith.constant 0 : index
    %c0_11 = arith.constant 0 : index
    %26 = vector.load %arg2[%c0_10, %c0_11] : memref<20x128xf32, #tpu.memory_space<vmem>>, vector<20x128xf32>
    tpu.vector_store %arg2[%c0_10, %c0_11], %25 {strides = array<i32>} : memref<20x128xf32, #tpu.memory_space<vmem>>, vector<20x128xf32>,
    return
  }
}

</mosaic_0001>

<llo_original>
// kernel: model_forward.1
$region0: #{model_forward.1}
  #allocation0 [shape = 'u32[]', space=smem, size = 0x4, offset = 0x4, fixed_abs, tag = 'smem constant byte address 0x4 - core index']
  #allocation1 [shape = 'u32[144,128]{1,0:T(1,128)}', space=vmem, size = 0x12000, scoped, tag = 'internal scratch']
  %s0 = inlined_call_operand.hbm [shape: f32[8,10], index: 0, kind: input, shape index: {}]
  %s1 = inlined_call_operand.hbm [shape: f32[168,384], index: 1, kind: input, shape index: {}]
  %s2 = inlined_call_operand.vmem [shape: f32[20,128], index: 2, kind: output, shape index: {}]
  %s3 = sld [smem:[#allocation0]]
  $region26: #{model_forward.1} parent=0
    _
  %s5 = ssub.s32 1, %s3
  %s6 = scalar_select 0, %s5, %s3
  $region1: #{model_forward.1} parent=0
    #allocation2 [shape = 'u8[4096]{0}', space=vmem, size = 0x1000, scoped, tag = 'input window, operand 0, single buffered']
    #allocation3 [shape = 's32[1]{0}', space=sflag, size = 0x4, scoped, tag = 'scoped memory for model_forward.1']
    #allocation4 [shape = 'u8[258048]{0}', space=vmem, size = 0x3f000, scoped, tag = 'input window, operand 1, single buffered']
    #allocation5 [shape = 's32[1]{0}', space=sflag, size = 0x4, scoped, tag = 'scoped memory for model_forward.1']
    %7 = vsyncpa [#allocation3], 0
    %8 = vsyncpa [#allocation5], 0
    // Predicated region
    $region2: #{model_forward.1} parent=1 // pred_check
      _
    $region3: #{model_forward.1} parent=1 // pred_check_branch
      %10 = sbr.rel (0) target = $region5
    $region4: #{model_forward.1} parent=1 // pred_region
      %s12 = ssub.s32 128, 128
      %13 = vsyncadd [#allocation3], %s12
      %s15 = sshll.u32 [#allocation2], 4
      %s16 = int_to_ptr.vmem [resolvable:$true] %s15
      %18 = dma.hbm_to_vmem [thread:$0]  %s0, 128, %s16, [#allocation3]
    $region5: #{model_forward.1} parent=1 // pred_fallthru
      _
    // Predicated region
    $region6: #{model_forward.1} parent=1 // pred_check
      _
    $region7: #{model_forward.1} parent=1 // pred_check_branch
      %20 = sbr.rel (0) target = $region9
    $region8: #{model_forward.1} parent=1 // pred_region
      %s22 = ssub.s32 8064, 8064
      %23 = vsyncadd [#allocation5], %s22
      %s24 = sshll.u32 [#allocation4], 4
      %s25 = int_to_ptr.vmem [resolvable:$true] %s24
      %30 = dma.hbm_to_vmem [thread:$0]  %s1, 8064, %s25, [#allocation5], 384, 384, 24
    $region9: #{model_forward.1} parent=1 // pred_fallthru
      _
    // Predicated region
    $region10: #{model_forward.1} parent=1 // pred_check
      _
    $region11: #{model_forward.1} parent=1 // pred_check_branch
      %32 = sbr.rel (0) target = $region13
    $region12: #{model_forward.1} parent=1 // pred_region
      %33 = dma.done [#allocation3], 128
    $region13: #{model_forward.1} parent=1 // pred_fallthru
      _
    // Predicated region
    $region14: #{model_forward.1} parent=1 // pred_check
      _
    $region15: #{model_forward.1} parent=1 // pred_check_branch
      %35 = sbr.rel (0) target = $region17
    $region16: #{model_forward.1} parent=1 // pred_region
      %36 = dma.done [#allocation5], 8064
    $region17: #{model_forward.1} parent=1 // pred_fallthru
      _
    %v37 = vld [vmem:[#allocation2] sm:$0xff]
    %v38 = vld [vmem:[#allocation4] sm:$0xff]
    %v39 = vld [vmem:[#allocation4 + $0x8] sm:$0xff]
    %v40 = vld [vmem:[#allocation4 + $0x10] sm:$0xff]
    %v41 = vld [vmem:[#allocation4 + $0x18] sm:$0x3]
    %v42 = vld [vmem:[#allocation4 + $0x20] sm:$0x3]
    %v43 = vld [vmem:[#allocation4 + $0x28] sm:$0x3]
    %v44 = vld [vmem:[#allocation4 + $0x30] sm:$0xff]
    %v45 = vld [vmem:[#allocation4 + $0x38] sm:$0xff]
    %v46 = vld [vmem:[#allocation4 + $0x40] sm:$0xff]
    %v47 = vld [vmem:[#allocation4 + $0x48] sm:$0xff]
    %v48 = vld [vmem:[#allocation4 + $0x50] sm:$0xff]
    %v49 = vld [vmem:[#allocation4 + $0x58] sm:$0xff]
    %v50 = vld [vmem:[#allocation4 + $0x60] sm:$0xf]
    %v51 = vld [vmem:[#allocation4 + $0x68] sm:$0xf]
    %v52 = vld [vmem:[#allocation4 + $0x70] sm:$0xf]
    %v53 = vld [vmem:[#allocation4 + $0x78] sm:$0xff]
    %v54 = vld [vmem:[#allocation4 + $0x90] sm:$0xff]
    %v55 = vld [vmem:[#allocation4 + $0xa8] sm:$0xff]
    %v56 = vld [vmem:[#allocation4 + $0xc0] sm:$0xff]
    %v57 = vld [vmem:[#allocation4 + $0xd8] sm:$0xff]
    %v58 = vld [vmem:[#allocation4 + $0xf0] sm:$0xff]
    %v59 = vld [vmem:[#allocation4 + $0x108] sm:$0xff]
    %v60 = vld [vmem:[#allocation4 + $0x120] sm:$0xff]
    %v61 = vld [vmem:[#allocation4 + $0x138] sm:$0xff]
    %v62 = vld [vmem:[#allocation4 + $0x150] sm:$0xff]
    %v63 = vld [vmem:[#allocation4 + $0x168] sm:$0xff]
    %v64 = vld [vmem:[#allocation4 + $0x180] sm:$0xff]
    %v65 = vld [vmem:[#allocation4 + $0x198] sm:$0xff]
    %v66 = vld [vmem:[#allocation4 + $0x1b0] sm:$0xff]
    %v67 = vld [vmem:[#allocation4 + $0x1c8] sm:$0xff]
    %v68 = vld [vmem:[#allocation4 + $0x1e0] sm:$0xff]
    %v69 = vld [vmem:[#allocation4 + $0x80] sm:$0xff]
    %v70 = vld [vmem:[#allocation4 + $0x98] sm:$0xff]
    %v71 = vld [vmem:[#allocation4 + $0xb0] sm:$0xf]
    %vm72 = vcmask 64512
    %v74 = vsel %vm72, %v69, 0
    %v77 = vsel %vm72, %v70, 0
    %v80 = vsel %vm72, %v71, 0
    %82 = vmatprep.subr.mxu0 0.0
    %83 = vmatpush1.msra.mxu0 0.0
    %84 = vmatprep.subr.mxu0 0.0
    %85 = vmatpush1.msra.mxu0 0.0
    %86 = vmatprep.subr.mxu0 0.0
    %87 = vmatpush1.msra.mxu0 0.0
    %88 = vmatprep.subr.mxu0 0.0
    %89 = vmatpush1.msra.mxu0 0.0
    %90 = vmatprep.subr.mxu0 0.0
    %91 = vmatpush1.msra.mxu0 0.0
    %92 = vmatprep.subr.mxu0 0.0
    %93 = vmatpush1.msra.mxu0 0.0
    %94 = vmatprep.subr.mxu0 0.0
    %95 = vmatpush1.msra.mxu0 0.0
    %96 = vmatprep.subr.mxu0 0.0
    %97 = vmatpush1.msra.mxu0 0.0
    %98 = vmatprep.subr.mxu0 0.0
    %99 = vmatpush1.msra.mxu0 0.0
    %100 = vmatprep.subr.mxu0 0.0
    %101 = vmatpush1.msra.mxu0 0.0
    %102 = vmatprep.subr.mxu0 0.0
    %103 = vmatpush1.msra.mxu0 0.0
    %104 = vmatprep.subr.mxu0 0.0
    %105 = vmatpush1.msra.mxu0 0.0
    %106 = vmatprep.subr.mxu0 0.0
    %107 = vmatpush1.msra.mxu0 0.0
    %108 = vmatprep.subr.mxu0 0.0
    %109 = vmatpush1.msra.mxu0 0.0
    %110 = vmatprep.subr.mxu0 0.0
    %111 = vmatpush1.msra.mxu0 0.0
    %112 = vmatprep.subr.mxu0 0.0
    %113 = vmatpush1.msra.mxu0 %v37
    %114 = vmatprep.subr.mxu0 0.0
    %115 = vmatpush2.msra.mxu0 0.0
    %116 = vmatprep.subr.mxu0 0.0
    %117 = vmatpush2.msra.mxu0 0.0
    %118 = vmatprep.subr.mxu0 0.0
    %119 = vmatpush2.msra.mxu0 0.0
    %120 = vmatprep.subr.mxu0 0.0
    %121 = vmatpush2.msra.mxu0 0.0
    %122 = vmatprep.subr.mxu0 0.0
    %123 = vmatpush2.msra.mxu0 0.0
    %124 = vmatprep.subr.mxu0 0.0
    %125 = vmatpush2.msra.mxu0 0.0
    %126 = vmatprep.subr.mxu0 0.0
    %127 = vmatpush2.msra.mxu0 0.0
    %128 = vmatprep.subr.mxu0 0.0
    %129 = vmatpush2.msra.mxu0 0.0
    %130 = vmatprep.subr.mxu0 0.0
    %131 = vmatpush2.msra.mxu0 0.0
    %132 = vmatprep.subr.mxu0 0.0
    %133 = vmatpush2.msra.mxu0 0.0
    %134 = vmatprep.subr.mxu0 0.0
    %135 = vmatpush2.msra.mxu0 0.0
    %136 = vmatprep.subr.mxu0 0.0
    %137 = vmatpush2.msra.mxu0 0.0
    %138 = vmatprep.subr.mxu0 0.0
    %139 = vmatpush2.msra.mxu0 0.0
    %140 = vmatprep.subr.mxu0 0.0
    %141 = vmatpush2.msra.mxu0 0.0
    %142 = vmatprep.subr.mxu0 0.0
    %143 = vmatpush2.msra.mxu0 0.0
    %144 = vmatprep.subr.mxu0 0.0
    %145 = vmatpush2.msra.mxu0 0.0
    %146 = vmatprep.mubr.f32.mxu0 0.0
    %147 = vmatmul.mubr.f32.gmra.mxu0 %v74
    %v148 = vpop.f32.mrf.mxu0
    %v149 = vadd.f32 0.0, %v148
    %v150 = vpop.f32.mrf.mxu0
    %151 = vmatprep.mubr.f32.mxu0 0.0
    %152 = vmatmul.mubr.f32.gmra.mxu0 %v77
    %v153 = vpop.f32.mrf.mxu0
    %v154 = vadd.f32 0.0, %v153
    %v155 = vpop.f32.mrf.mxu0
    %156 = vmatprep.mubr.f32.mxu0 0.0
    %157 = vmatmul.mubr.f32.gmra.mxu0 %v80
    %v158 = vpop.f32.mrf.mxu0
    %v159 = vadd.f32 0.0, %v158
    %v160 = vpop.f32.mrf.mxu0
    %161 = vdwg.mxu0
    %vm162 = vcmask 80896
    %v164 = vsel %vm162, %v149, 0
    %v167 = vsel %vm162, %v154, 0
    %v170 = vsel %vm162, %v159, 0
    %vm172 = vcmask 1041408
    %v174 = vsel %vm172, %v41, 0
    %v177 = vsel %vm172, %v42, 0
    %v180 = vsel %vm172, %v43, 0
    %182 = vmatprep.subr.mxu0 0.0
    %183 = vmatpush1.msra.mxu0 0.0
    %184 = vmatprep.subr.mxu0 0.0
    %185 = vmatpush1.msra.mxu0 0.0
    %186 = vmatprep.subr.mxu0 0.0
    %187 = vmatpush1.msra.mxu0 0.0
    %188 = vmatprep.subr.mxu0 0.0
    %189 = vmatpush1.msra.mxu0 0.0
    %190 = vmatprep.subr.mxu0 0.0
    %191 = vmatpush1.msra.mxu0 0.0
    %192 = vmatprep.subr.mxu0 0.0
    %193 = vmatpush1.msra.mxu0 0.0
    %194 = vmatprep.subr.mxu0 0.0
    %195 = vmatpush1.msra.mxu0 0.0
    %196 = vmatprep.subr.mxu0 0.0
    %197 = vmatpush1.msra.mxu0 0.0
    %198 = vmatprep.subr.mxu0 0.0
    %199 = vmatpush1.msra.mxu0 0.0
    %200 = vmatprep.subr.mxu0 0.0
    %201 = vmatpush1.msra.mxu0 0.0
    %202 = vmatprep.subr.mxu0 0.0
    %203 = vmatpush1.msra.mxu0 0.0
    %204 = vmatprep.subr.mxu0 0.0
    %205 = vmatpush1.msra.mxu0 0.0
    %206 = vmatprep.subr.mxu0 0.0
    %207 = vmatpush1.msra.mxu0 0.0
    %208 = vmatprep.subr.mxu0 0.0
    %209 = vmatpush1.msra.mxu0 0.0
    %210 = vmatprep.subr.mxu0 %v177
    %211 = vmatpush1.msra.mxu0 %v174
    %212 = vmatprep.subr.mxu0 %v39
    %213 = vmatpush1.msra.mxu0 %v38
    %214 = vmatprep.subr.mxu0 0.0
    %215 = vmatpush2.msra.mxu0 0.0
    %216 = vmatprep.subr.mxu0 0.0
    %217 = vmatpush2.msra.mxu0 0.0
    %218 = vmatprep.subr.mxu0 0.0
    %219 = vmatpush2.msra.mxu0 0.0
    %220 = vmatprep.subr.mxu0 0.0
    %221 = vmatpush2.msra.mxu0 0.0
    %222 = vmatprep.subr.mxu0 0.0
    %223 = vmatpush2.msra.mxu0 0.0
    %224 = vmatprep.subr.mxu0 0.0
    %225 = vmatpush2.msra.mxu0 0.0
    %226 = vmatprep.subr.mxu0 0.0
    %227 = vmatpush2.msra.mxu0 0.0
    %228 = vmatprep.subr.mxu0 0.0
    %229 = vmatpush2.msra.mxu0 0.0
    %230 = vmatprep.subr.mxu0 0.0
    %231 = vmatpush2.msra.mxu0 0.0
    %232 = vmatprep.subr.mxu0 0.0
    %233 = vmatpush2.msra.mxu0 0.0
    %234 = vmatprep.subr.mxu0 0.0
    %235 = vmatpush2.msra.mxu0 0.0
    %236 = vmatprep.subr.mxu0 0.0
    %237 = vmatpush2.msra.mxu0 0.0
    %238 = vmatprep.subr.mxu0 0.0
    %239 = vmatpush2.msra.mxu0 0.0
    %240 = vmatprep.subr.mxu0 0.0
    %241 = vmatpush2.msra.mxu0 0.0
    %242 = vmatprep.subr.mxu0 0.0
    %243 = vmatpush2.msra.mxu0 0.0
    %244 = vmatprep.subr.mxu0 0.0
    %245 = vmatpush2.msra.mxu0 0.0
    %246 = vmatprep.mubr.f32.mxu0 0.0
    %247 = vmatmul.mubr.f32.gmra.mxu0 %v164
    %v248 = vpop.f32.mrf.mxu0
    %v249 = vadd.f32 %v44, %v248
    %v250 = vpop.f32.mrf.mxu0
    %v251 = vadd.f32 %v45, %v250
    %252 = vmatprep.mubr.f32.mxu0 0.0
    %253 = vmatmul.mubr.f32.gmra.mxu0 %v167
    %v254 = vpop.f32.mrf.mxu0
    %v255 = vadd.f32 %v47, %v254
    %v256 = vpop.f32.mrf.mxu0
    %v257 = vadd.f32 %v48, %v256
    %258 = vmatprep.mubr.f32.mxu0 0.0
    %259 = vmatmul.mubr.f32.gmra.mxu0 %v170
    %v260 = vpop.f32.mrf.mxu0
    %v261 = vadd.f32 %v50, %v260
    %v262 = vpop.f32.mrf.mxu0
    %v263 = vadd.f32 %v51, %v262
    %264 = vdwg.mxu0
    %265 = vmatprep.subr.mxu0 0.0
    %266 = vmatpush1.msra.mxu0 0.0
    %267 = vmatprep.subr.mxu0 0.0
    %268 = vmatpush1.msra.mxu0 0.0
    %269 = vmatprep.subr.mxu0 0.0
    %270 = vmatpush1.msra.mxu0 0.0
    %271 = vmatprep.subr.mxu0 0.0
    %272 = vmatpush1.msra.mxu0 0.0
    %273 = vmatprep.subr.mxu0 0.0
    %274 = vmatpush1.msra.mxu0 0.0
    %275 = vmatprep.subr.mxu0 0.0
    %276 = vmatpush1.msra.mxu0 0.0
    %277 = vmatprep.subr.mxu0 0.0
    %278 = vmatpush1.msra.mxu0 0.0
    %279 = vmatprep.subr.mxu0 0.0
    %280 = vmatpush1.msra.mxu0 0.0
    %281 = vmatprep.subr.mxu0 0.0
    %282 = vmatpush1.msra.mxu0 0.0
    %283 = vmatprep.subr.mxu0 0.0
    %284 = vmatpush1.msra.mxu0 0.0
    %285 = vmatprep.subr.mxu0 0.0
    %286 = vmatpush1.msra.mxu0 0.0
    %287 = vmatprep.subr.mxu0 0.0
    %288 = vmatpush1.msra.mxu0 0.0
    %289 = vmatprep.subr.mxu0 0.0
    %290 = vmatpush1.msra.mxu0 0.0
    %291 = vmatprep.subr.mxu0 0.0
    %292 = vmatpush1.msra.mxu0 0.0
    %293 = vmatprep.subr.mxu0 0.0
    %294 = vmatpush1.msra.mxu0 %v180
    %295 = vmatprep.subr.mxu0 0.0
    %296 = vmatpush1.msra.mxu0 %v40
    %297 = vmatprep.subr.mxu0 0.0
    %298 = vmatpush2.msra.mxu0 0.0
    %299 = vmatprep.subr.mxu0 0.0
    %300 = vmatpush2.msra.mxu0 0.0
    %301 = vmatprep.subr.mxu0 0.0
    %302 = vmatpush2.msra.mxu0 0.0
    %303 = vmatprep.subr.mxu0 0.0
    %304 = vmatpush2.msra.mxu0 0.0
    %305 = vmatprep.subr.mxu0 0.0
    %306 = vmatpush2.msra.mxu0 0.0
    %307 = vmatprep.subr.mxu0 0.0
    %308 = vmatpush2.msra.mxu0 0.0
    %309 = vmatprep.subr.mxu0 0.0
    %310 = vmatpush2.msra.mxu0 0.0
    %311 = vmatprep.subr.mxu0 0.0
    %312 = vmatpush2.msra.mxu0 0.0
    %313 = vmatprep.subr.mxu0 0.0
    %314 = vmatpush2.msra.mxu0 0.0
    %315 = vmatprep.subr.mxu0 0.0
    %316 = vmatpush2.msra.mxu0 0.0
    %317 = vmatprep.subr.mxu0 0.0
    %318 = vmatpush2.msra.mxu0 0.0
    %319 = vmatprep.subr.mxu0 0.0
    %320 = vmatpush2.msra.mxu0 0.0
    %321 = vmatprep.subr.mxu0 0.0
    %322 = vmatpush2.msra.mxu0 0.0
    %323 = vmatprep.subr.mxu0 0.0
    %324 = vmatpush2.msra.mxu0 0.0
    %325 = vmatprep.subr.mxu0 0.0
    %326 = vmatpush2.msra.mxu0 0.0
    %327 = vmatprep.subr.mxu0 0.0
    %328 = vmatpush2.msra.mxu0 0.0
    %329 = vmatprep.mubr.f32.mxu0 0.0
    %330 = vmatmul.mubr.f32.gmra.mxu0 %v164
    %v331 = vpop.f32.mrf.mxu0
    %v332 = vadd.f32 %v46, %v331
    %v333 = vpop.f32.mrf.mxu0
    %334 = vmatprep.mubr.f32.mxu0 0.0
    %335 = vmatmul.mubr.f32.gmra.mxu0 %v167
    %v336 = vpop.f32.mrf.mxu0
    %v337 = vadd.f32 %v49, %v336
    %v338 = vpop.f32.mrf.mxu0
    %339 = vmatprep.mubr.f32.mxu0 0.0
    %340 = vmatmul.mubr.f32.gmra.mxu0 %v170
    %v341 = vpop.f32.mrf.mxu0
    %v342 = vadd.f32 %v52, %v341
    %v343 = vpop.f32.mrf.mxu0
    %344 = vdwg.mxu0
    %v345 = vxor.u32 %v249, 2147483648
    %v346 = vxor.u32 %v255, 2147483648
    %v347 = vxor.u32 %v261, 2147483648
    %v348 = vmul.f32 %v345, 1.442695
    %v349 = vpow.pop %v348
    %v350 = vmul.f32 %v346, 1.442695
    %v351 = vpow.pop %v350
    %v352 = vmul.f32 %v347, 1.442695
    %v353 = vpow.pop %v352
    %v354 = vadd.f32 %v349, 1.0
    %v355 = vadd.f32 %v351, 1.0
    %v356 = vadd.f32 %v353, 1.0
    %v357 = vrcp.pop %v354
    %v358 = vmul.f32 1.0, %v357
    %v359 = vrcp.pop %v355
    %v360 = vmul.f32 1.0, %v359
    %v361 = vrcp.pop %v356
    %v362 = vmul.f32 1.0, %v361
    %v363 = vtanh.pop %v251
    %v364 = vtanh.pop %v257
    %v365 = vtanh.pop %v263
    %v366 = vxor.u32 %v332, 2147483648
    %v367 = vxor.u32 %v337, 2147483648
    %v368 = vxor.u32 %v342, 2147483648
    %v369 = vmul.f32 %v366, 1.442695
    %v370 = vpow.pop %v369
    %v371 = vmul.f32 %v367, 1.442695
    %v372 = vpow.pop %v371
    %v373 = vmul.f32 %v368, 1.442695
    %v374 = vpow.pop %v373
    %v375 = vadd.f32 %v370, 1.0
    %v376 = vadd.f32 %v372, 1.0
    %v377 = vadd.f32 %v374, 1.0
    %v378 = vrcp.pop %v375
    %v379 = vmul.f32 1.0, %v378
    %v380 = vrcp.pop %v376
    %v381 = vmul.f32 1.0, %v380
    %v382 = vrcp.pop %v377
    %v383 = vmul.f32 1.0, %v382
    %v384 = vmul.f32 %v358, %v363
    %v385 = vmul.f32 %v360, %v364
    %v386 = vmul.f32 %v362, %v365
    %v387 = vtanh.pop %v384
    %v388 = vtanh.pop %v385
    %v389 = vtanh.pop %v386
    %v390 = vmul.f32 %v379, %v387
    %v391 = vmul.f32 %v381, %v388
    %v392 = vmul.f32 %v383, %v389
    %393 = vmatprep.subr.mxu0 0.0
    %394 = vmatpush1.msra.mxu0 %v68
    %395 = vmatprep.subr.mxu0 0.0
    %396 = vmatpush1.msra.mxu0 %v67
    %397 = vmatprep.subr.mxu0 0.0
    %398 = vmatpush1.msra.mxu0 %v66
    %399 = vmatprep.subr.mxu0 0.0
    %400 = vmatpush1.msra.mxu0 %v65
    %401 = vmatprep.subr.mxu0 0.0
    %402 = vmatpush1.msra.mxu0 %v64
    %403 = vmatprep.subr.mxu0 0.0
    %404 = vmatpush1.msra.mxu0 %v63
    %405 = vmatprep.subr.mxu0 0.0
    %406 = vmatpush1.msra.mxu0 %v62
    %407 = vmatprep.subr.mxu0 0.0
    %408 = vmatpush1.msra.mxu0 %v61
    %409 = vmatprep.subr.mxu0 0.0
    %410 = vmatpush1.msra.mxu0 %v60
    %411 = vmatprep.subr.mxu0 0.0
    %412 = vmatpush1.msra.mxu0 %v59
    %413 = vmatprep.subr.mxu0 0.0
    %414 = vmatpush1.msra.mxu0 %v58
    %415 = vmatprep.subr.mxu0 0.0
    %416 = vmatpush1.msra.mxu0 %v57
    %417 = vmatprep.subr.mxu0 0.0
    %418 = vmatpush1.msra.mxu0 %v56
    %419 = vmatprep.subr.mxu0 0.0
    %420 = vmatpush1.msra.mxu0 %v55
    %421 = vmatprep.subr.mxu0 0.0
    %422 = vmatpush1.msra.mxu0 %v54
    %423 = vmatprep.subr.mxu0 0.0
    %424 = vmatpush1.msra.mxu0 %v53
    %425 = vmatprep.subr.mxu0 0.0
    %426 = vmatpush2.msra.mxu0 0.0
    %427 = vmatprep.subr.mxu0 0.0
    %428 = vmatpush2.msra.mxu0 0.0
    %429 = vmatprep.subr.mxu0 0.0
    %430 = vmatpush2.msra.mxu0 0.0
    %431 = vmatprep.subr.mxu0 0.0
    %432 = vmatpush2.msra.mxu0 0.0
    %433 = vmatprep.subr.mxu0 0.0
    %434 = vmatpush2.msra.mxu0 0.0
    %435 = vmatprep.subr.mxu0 0.0
    %436 = vmatpush2.msra.mxu0 0.0
    %437 = vmatprep.subr.mxu0 0.0
    %438 = vmatpush2.msra.mxu0 0.0
    %439 = vmatprep.subr.mxu0 0.0
    %440 = vmatpush2.msra.mxu0 0.0
    %441 = vmatprep.subr.mxu0 0.0
    %442 = vmatpush2.msra.mxu0 0.0
    %443 = vmatprep.subr.mxu0 0.0
    %444 = vmatpush2.msra.mxu0 0.0
    %445 = vmatprep.subr.mxu0 0.0
    %446 = vmatpush2.msra.mxu0 0.0
    %447 = vmatprep.subr.mxu0 0.0
    %448 = vmatpush2.msra.mxu0 0.0
    %449 = vmatprep.subr.mxu0 0.0
    %450 = vmatpush2.msra.mxu0 0.0
    %451 = vmatprep.subr.mxu0 0.0
    %452 = vmatpush2.msra.mxu0 0.0
    %453 = vmatprep.subr.mxu0 0.0
    %454 = vmatpush2.msra.mxu0 0.0
    %455 = vmatprep.subr.mxu0 0.0
    %456 = vmatpush2.msra.mxu0 0.0
    %457 = vmatprep.mubr.f32.mxu0 0.0
    %458 = vmatmul.mubr.f32.gmra.mxu0 %v390
    %v459 = vpop.f32.mrf.mxu0
    %v460 = vadd.f32 0.0, %v459
    %v461 = vpop.f32.mrf.mxu0
    %462 = vmatprep.mubr.f32.mxu0 0.0
    %463 = vmatmul.mubr.f32.gmra.mxu0 %v391
    %v464 = vpop.f32.mrf.mxu0
    %v465 = vadd.f32 0.0, %v464
    %v466 = vpop.f32.mrf.mxu0
    %467 = vmatprep.mubr.f32.mxu0 0.0
    %468 = vmatmul.mubr.f32.gmra.mxu0 %v392
    %v469 = vpop.f32.mrf.mxu0
    %v470 = vadd.f32 0.0, %v469
    %v471 = vpop.f32.mrf.mxu0
    %472 = vdwg.mxu0
    %473 = vst [vmem:[%s2] sm:$0xff] %v460
    %474 = vst [vmem:[%s2 + $0x8] sm:$0xff] %v465
    %475 = vst [vmem:[%s2 + $0x10] sm:$0xf] %v470
    // Predicated region
    $region18: #{model_forward.1} parent=1 // pred_check
      _
    $region19: #{model_forward.1} parent=1 // pred_check_branch
      %477 = sbr.rel (0) target = $region21
    $region20: #{model_forward.1} parent=1 // pred_region
      _
    $region21: #{model_forward.1} parent=1 // pred_fallthru
      _
    // Predicated region
    $region22: #{model_forward.1} parent=1 // pred_check
      _
    $region23: #{model_forward.1} parent=1 // pred_check_branch
      %479 = sbr.rel (0) target = $region25
    $region24: #{model_forward.1} parent=1 // pred_region
      _
    $region25: #{model_forward.1} parent=1 // pred_fallthru
      _
    %480 = vsyncpa [#allocation3], 1
    %481 = vsyncpa [#allocation5], 1

</llo_original>
